<compile_context>
chip_gen: v5e
topology: v5e:2x2
jax: 0.10.0
libtpu: 0.0.40
codegen_flags: <defaults>
</compile_context>

<pallas_src>
import functools

import jax
import jax.numpy as jnp
from jax.experimental import pallas as pl
from jax.experimental.pallas import tpu as pltpu  # noqa: F401  (TPU backend; tuning hooks)


def attention_kernel(x_ref, gamma_ref, beta_ref, wqkv_ref, wo_ref, bo_ref, out_ref,
                     *, heads, dim_head, eps):
    B, N, DIM = x_ref.shape
    BH = B * heads
    dh = dim_head

    x = x_ref[...].astype(jnp.float32)                        # (B, N, DIM)

    # --- LayerNorm over features (biased variance, eps=1e-5, matches nn.LayerNorm) ---
    mean = jnp.mean(x, axis=-1, keepdims=True)
    var = jnp.mean((x - mean) ** 2, axis=-1, keepdims=True)
    xn = (x - mean) * jax.lax.rsqrt(var + eps)
    xn = xn * gamma_ref[...] + beta_ref[...]                  # (1, DIM) broadcasts

    # Replicate normalized activations across heads so all matmuls below are
    # leading-batch batched matmuls (batch = B*heads). Pure leading-dim
    # broadcast/reshape -> no lane shuffles.
    xnb = jnp.broadcast_to(xn[:, None], (B, heads, N, DIM)).reshape(BH, N, DIM)

    # --- fused Q/K/V projection (softmax scale already folded into the Q weights) ---
    qkv = jnp.einsum('bnc,bcd->bnd', xnb, wqkv_ref[...],
                     preferred_element_type=jnp.float32)      # (BH, N, 3*dh)
    q = qkv[:, :, 0 * dh:1 * dh]
    k = qkv[:, :, 1 * dh:2 * dh]
    v = qkv[:, :, 2 * dh:3 * dh]

    # --- scaled dot-product attention, batched over (batch, head); no explicit .T ---
    dots = jnp.einsum('bnd,bmd->bnm', q, k,
                      preferred_element_type=jnp.float32)     # (BH, N, N)
    m = jnp.max(dots, axis=-1, keepdims=True)
    e = jnp.exp(dots - m)
    attn = e * pl.reciprocal(jnp.sum(e, axis=-1, keepdims=True), approx=True)
    # dropout(p=0.0) in eval mode is the identity -> nothing to do.
    ctx = jnp.einsum('bnm,bmd->bnd', attn, v,
                     preferred_element_type=jnp.float32)      # (BH, N, dh)

    # --- output projection: per-head partial products, reduced over heads ---
    y_part = jnp.einsum('bnd,bdk->bnk', ctx, wo_ref[...],
                        preferred_element_type=jnp.float32)   # (BH, N, DIM)
    y = jnp.sum(y_part.reshape(B, heads, N, DIM), axis=1) + bo_ref[...]
    out_ref[...] = y.astype(out_ref.dtype)


def attention_forward(x, gamma, beta, wq, wk, wv, wo, bo, *, heads, dim_head):
    B, N, DIM = x.shape
    scale = dim_head ** -0.5

    # Pre-arrange weights OUTSIDE the kernel (plain XLA ops, done once):
    #   (DIM, heads*dh) -> (heads, DIM, dh), Q-scale folded in, Q|K|V fused on the
    #   last axis, then tiled over batch so the kernel sees one (B*heads) batch dim.
    def per_head(w):                                    # (DIM, INNER) -> (heads, DIM, dh)
        return jnp.transpose(w.reshape(DIM, heads, dim_head), (1, 0, 2))

    wqkv_h = jnp.concatenate(
        [per_head(wq * scale), per_head(wk), per_head(wv)], axis=-1)   # (heads, DIM, 3*dh)
    wqkv_bh = jnp.tile(wqkv_h, (B, 1, 1))                              # (B*heads, DIM, 3*dh)
    wo_bh = jnp.tile(wo.reshape(heads, dim_head, DIM), (B, 1, 1))      # (B*heads, dh, DIM)

    kernel = functools.partial(attention_kernel, heads=heads, dim_head=dim_head, eps=1e-5)

    # Single invocation, whole-array blocks resident in VMEM.
    # TODO(synk): on v7x (2 TensorCores/chip) with larger batch, shard a leading
    # "parallel" grid axis over batch instead of collapsing it.
    return pl.pallas_call(
        kernel,
        out_shape=jax.ShapeDtypeStruct((B, N, DIM), x.dtype),
    )(x, gamma, beta, wqkv_bh, wo_bh, bo)


def reference_forward(x, gamma, beta, wq, wk, wv, wo, bo, *, heads, dim_head):
    eps = 1e-5
    scale = dim_head ** -0.5
    mean = jnp.mean(x, axis=-1, keepdims=True)
    var = jnp.mean((x - mean) ** 2, axis=-1, keepdims=True)
    xn = (x - mean) / jnp.sqrt(var + eps) * gamma[0] + beta[0]
    q = xn @ wq
    k = xn @ wk
    v = xn @ wv
    B, N, INNER = q.shape
    def split(t):  # b n (h d) -> b h n d
        return t.reshape(B, N, heads, dim_head).transpose(0, 2, 1, 3)
    qh, kh, vh = split(q), split(k), split(v)
    dots = jnp.einsum('bhid,bhjd->bhij', qh, kh) * scale
    attn = jax.nn.softmax(dots, axis=-1)
    out = jnp.einsum('bhij,bhjd->bhid', attn, vh)
    out = out.transpose(0, 2, 1, 3).reshape(B, N, INNER)
    return out @ wo + bo[0]


if __name__ == "__main__":
    # Small shapes consistent with the module: dim=32, heads=4, dim_head=16.
    B, N, DIM = 2, 8, 32
    HEADS, DIM_HEAD = 4, 16
    INNER = HEADS * DIM_HEAD

    key = jax.random.PRNGKey(0)
    kx, kq, kkv, ko, kob, kg, kb = jax.random.split(key, 7)

    x = jax.random.normal(kx, (B, N, DIM), dtype=jnp.float32)

    # Deterministic synthetic parameters (PyTorch shapes, stored transposed for x @ W).
    gamma = 1.0 + 0.1 * jax.random.normal(kg, (1, DIM), dtype=jnp.float32)   # LayerNorm weight
    beta = 0.1 * jax.random.normal(kb, (1, DIM), dtype=jnp.float32)          # LayerNorm bias
    wq = 0.05 * jax.random.normal(kq, (DIM, INNER), dtype=jnp.float32)       # to_q.weight.T
    wkv = 0.05 * jax.random.normal(kkv, (DIM, 2 * INNER), dtype=jnp.float32)  # to_kv.weight.T
    wk, wv = wkv[:, :INNER], wkv[:, INNER:]
    wo = 0.05 * jax.random.normal(ko, (INNER, DIM), dtype=jnp.float32)        # to_out[0].weight.T
    bo = 0.05 * jax.random.normal(kob, (1, DIM), dtype=jnp.float32)           # to_out[0].bias

    out = attention_forward(x, gamma, beta, wq, wk, wv, wo, bo,
                            heads=HEADS, dim_head=DIM_HEAD)
    out = jax.block_until_ready(out)

    ref = reference_forward(x, gamma, beta, wq, wk, wv, wo, bo,
                            heads=HEADS, dim_head=DIM_HEAD)
    assert out.shape == (B, N, DIM)
    # Tolerance widened vs exact-math because the softmax denominator uses the EUP
    # approximate reciprocal (~bf16-level accuracy); observed error is ~1e-3.
    assert jnp.allclose(out, ref, rtol=1e-2, atol=1e-2), "mismatch vs reference"

    print("KERNEL_OK")
</pallas_src>

<mosaic_0001>
module attributes {stable_mosaic.version = 11 : i64} {
  func.func @attention_kernel(%arg0: memref<2x8x32xf32, #tpu.memory_space<vmem>>, %arg1: memref<1x32xf32, #tpu.memory_space<vmem>>, %arg2: memref<1x32xf32, #tpu.memory_space<vmem>>, %arg3: memref<8x32x48xf32, #tpu.memory_space<vmem>>, %arg4: memref<8x16x32xf32, #tpu.memory_space<vmem>>, %arg5: memref<1x32xf32, #tpu.memory_space<vmem>>, %arg6: memref<2x8x32xf32, #tpu.memory_space<vmem>>) attributes {dimension_semantics = [], scalar_prefetch = 0 : i64, scratch_operands = 0 : i64, tpu.core_type = #tpu.core_type<tc>} {
    %c0 = arith.constant 0 : index
    %c0_0 = arith.constant 0 : index
    %c0_1 = arith.constant 0 : index
    %0 = vector.load %arg0[%c0, %c0_0, %c0_1] : memref<2x8x32xf32, #tpu.memory_space<vmem>>, vector<2x8x32xf32>
    %cst = arith.constant dense<0.000000e+00> : vector<2x8xf32>
    %1 = vector.multi_reduction <add>, %0, %cst [2] : vector<2x8x32xf32> to vector<2x8xf32>
    %2 = vector.shape_cast %1 : vector<2x8xf32> to vector<2x8x1xf32>
    %cst_2 = arith.constant 3.200000e+01 : f32
    %3 = vector.broadcast %cst_2 : f32 to vector<2x8x1xf32>
    %4 = arith.divf %2, %3 : vector<2x8x1xf32>
    %5 = vector.broadcast %4 : vector<2x8x1xf32> to vector<2x8x32xf32>
    %6 = arith.subf %0, %5 : vector<2x8x32xf32>
    %7 = arith.mulf %6, %6 : vector<2x8x32xf32>
    %cst_3 = arith.constant dense<0.000000e+00> : vector<2x8xf32>
    %8 = vector.multi_reduction <add>, %7, %cst_3 [2] : vector<2x8x32xf32> to vector<2x8xf32>
    %9 = vector.shape_cast %8 : vector<2x8xf32> to vector<2x8x1xf32>
    %cst_4 = arith.constant 3.200000e+01 : f32
    %10 = vector.broadcast %cst_4 : f32 to vector<2x8x1xf32>
    %11 = arith.divf %9, %10 : vector<2x8x1xf32>
    %12 = vector.broadcast %4 : vector<2x8x1xf32> to vector<2x8x32xf32>
    %13 = arith.subf %0, %12 : vector<2x8x32xf32>
    %cst_5 = arith.constant 9.99999974E-6 : f32
    %14 = vector.broadcast %cst_5 : f32 to vector<2x8x1xf32>
    %15 = arith.addf %11, %14 : vector<2x8x1xf32>
    %16 = math.rsqrt %15 : vector<2x8x1xf32>
    %17 = vector.broadcast %16 : vector<2x8x1xf32> to vector<2x8x32xf32>
    %18 = arith.mulf %13, %17 : vector<2x8x32xf32>
    %c0_6 = arith.constant 0 : index
    %c0_7 = arith.constant 0 : index
    %19 = vector.load %arg1[%c0_6, %c0_7] : memref<1x32xf32, #tpu.memory_space<vmem>>, vector<1x32xf32>
    %20 = vector.shape_cast %19 : vector<1x32xf32> to vector<1x1x32xf32>
    %21 = vector.broadcast %20 : vector<1x1x32xf32> to vector<2x8x32xf32>
    %22 = arith.mulf %18, %21 : vector<2x8x32xf32>
    %c0_8 = arith.constant 0 : index
    %c0_9 = arith.constant 0 : index
    %23 = vector.load %arg2[%c0_8, %c0_9] : memref<1x32xf32, #tpu.memory_space<vmem>>, vector<1x32xf32>
    %24 = vector.shape_cast %23 : vector<1x32xf32> to vector<1x1x32xf32>
    %25 = vector.broadcast %24 : vector<1x1x32xf32> to vector<2x8x32xf32>
    %26 = arith.addf %22, %25 : vector<2x8x32xf32>
    %27 = vector.shape_cast %26 : vector<2x8x32xf32> to vector<2x1x8x32xf32>
    %28 = vector.shape_cast %27 : vector<2x1x8x32xf32> to vector<2x1x8x32xf32>
    %29 = vector.broadcast %28 : vector<2x1x8x32xf32> to vector<2x4x8x32xf32>
    %30 = vector.shape_cast %29 : vector<2x4x8x32xf32> to vector<8x8x32xf32>
    %c0_10 = arith.constant 0 : index
    %c0_11 = arith.constant 0 : index
    %c0_12 = arith.constant 0 : index
    %31 = vector.load %arg3[%c0_10, %c0_11, %c0_12] : memref<8x32x48xf32, #tpu.memory_space<vmem>>, vector<8x32x48xf32>
    "tpu.trace_start"() <{level = 10 : i32, message = "bnc,bcd->bnd"}> : () -> ()
    %cst_13 = arith.constant dense<0.000000e+00> : vector<8x8x48xf32>
    %32 = tpu.matmul %30, %31, %cst_13 {dimension_numbers = #tpu.dot_dimension_numbers<[2], [1], [1], [2], [0, 0, 0, 1, 1, 2], [0], [0]>} : vector<8x8x32xf32>, vector<8x32x48xf32>, vector<8x8x48xf32> -> vector<8x8x48xf32>
    "tpu.trace_stop"() : () -> ()
    %33 = vector.extract_strided_slice %32 {offsets = [0, 0, 0], sizes = [8, 8, 16], strides = [1, 1, 1]} : vector<8x8x48xf32> to vector<8x8x16xf32>
    %34 = vector.extract_strided_slice %32 {offsets = [0, 0, 16], sizes = [8, 8, 16], strides = [1, 1, 1]} : vector<8x8x48xf32> to vector<8x8x16xf32>
    %35 = vector.extract_strided_slice %32 {offsets = [0, 0, 32], sizes = [8, 8, 16], strides = [1, 1, 1]} : vector<8x8x48xf32> to vector<8x8x16xf32>
    "tpu.trace_start"() <{level = 10 : i32, message = "bnd,bmd->bnm"}> : () -> ()
    %cst_14 = arith.constant dense<0.000000e+00> : vector<8x8x8xf32>
    %36 = tpu.matmul %33, %34, %cst_14 {dimension_numbers = #tpu.dot_dimension_numbers<[2], [2], [1], [1], [0, 0, 0, 1, 1, 1], [0], [0]>} : vector<8x8x16xf32>, vector<8x8x16xf32>, vector<8x8x8xf32> -> vector<8x8x8xf32>
    "tpu.trace_stop"() : () -> ()
    %cst_15 = arith.constant dense<0xFF800000> : vector<8x8xf32>
    %37 = vector.multi_reduction <maximumf>, %36, %cst_15 [2] : vector<8x8x8xf32> to vector<8x8xf32>
    %38 = vector.shape_cast %37 : vector<8x8xf32> to vector<8x8x1xf32>
    %39 = vector.broadcast %38 : vector<8x8x1xf32> to vector<8x8x8xf32>
    %40 = arith.subf %36, %39 : vector<8x8x8xf32>
    %41 = math.exp %40 : vector<8x8x8xf32>
    %cst_16 = arith.constant dense<0.000000e+00> : vector<8x8xf32>
    %42 = vector.multi_reduction <add>, %41, %cst_16 [2] : vector<8x8x8xf32> to vector<8x8xf32>
    %43 = vector.shape_cast %42 : vector<8x8xf32> to vector<8x8x1xf32>
    %44 = tpu.reciprocal %43 {approx = true} : vector<8x8x1xf32> -> vector<8x8x1xf32>
    %45 = vector.broadcast %44 : vector<8x8x1xf32> to vector<8x8x8xf32>
    %46 = arith.mulf %41, %45 : vector<8x8x8xf32>
    "tpu.trace_start"() <{level = 10 : i32, message = "bnm,bmd->bnd"}> : () -> ()
    %cst_17 = arith.constant dense<0.000000e+00> : vector<8x8x16xf32>
    %47 = tpu.matmul %46, %35, %cst_17 {dimension_numbers = #tpu.dot_dimension_numbers<[2], [1], [1], [2], [0, 0, 0, 1, 1, 2], [0], [0]>} : vector<8x8x8xf32>, vector<8x8x16xf32>, vector<8x8x16xf32> -> vector<8x8x16xf32>
    "tpu.trace_stop"() : () -> ()
    %c0_18 = arith.constant 0 : index
    %c0_19 = arith.constant 0 : index
    %c0_20 = arith.constant 0 : index
    %48 = vector.load %arg4[%c0_18, %c0_19, %c0_20] : memref<8x16x32xf32, #tpu.memory_space<vmem>>, vector<8x16x32xf32>
    "tpu.trace_start"() <{level = 10 : i32, message = "bnd,bdk->bnk"}> : () -> ()
    %cst_21 = arith.constant dense<0.000000e+00> : vector<8x8x32xf32>
    %49 = tpu.matmul %47, %48, %cst_21 {dimension_numbers = #tpu.dot_dimension_numbers<[2], [1], [1], [2], [0, 0, 0, 1, 1, 2], [0], [0]>} : vector<8x8x16xf32>, vector<8x16x32xf32>, vector<8x8x32xf32> -> vector<8x8x32xf32>
    "tpu.trace_stop"() : () -> ()
    %50 = vector.shape_cast %49 : vector<8x8x32xf32> to vector<2x4x8x32xf32>
    %cst_22 = arith.constant dense<0.000000e+00> : vector<2x8x32xf32>
    %51 = vector.multi_reduction <add>, %50, %cst_22 [1] : vector<2x4x8x32xf32> to vector<2x8x32xf32>
    %c0_23 = arith.constant 0 : index
    %c0_24 = arith.constant 0 : index
    %52 = vector.load %arg5[%c0_23, %c0_24] : memref<1x32xf32, #tpu.memory_space<vmem>>, vector<1x32xf32>
    %53 = vector.shape_cast %52 : vector<1x32xf32> to vector<1x1x32xf32>
    %54 = vector.broadcast %53 : vector<1x1x32xf32> to vector<2x8x32xf32>
    %55 = arith.addf %51, %54 : vector<2x8x32xf32>
    %c0_25 = arith.constant 0 : index
    %c0_26 = arith.constant 0 : index
    %c0_27 = arith.constant 0 : index
    %56 = vector.load %arg6[%c0_25, %c0_26, %c0_27] : memref<2x8x32xf32, #tpu.memory_space<vmem>>, vector<2x8x32xf32>
    tpu.vector_store %arg6[%c0_25, %c0_26, %c0_27], %55 {strides = array<i32>} : memref<2x8x32xf32, #tpu.memory_space<vmem>>, vector<2x8x32xf32>,
    return
  }
}

</mosaic_0001>

<llo_original>
// kernel: tpu_custom_call.1
$region0: #{tpu_custom_call.1}
  #allocation0 [shape = 'u32[]', space=smem, size = 0x4, offset = 0x4, fixed_abs, tag = 'smem constant byte address 0x4 - core index']
  #allocation1 [shape = 'u32[72,128]{1,0:T(1,128)}', space=vmem, size = 0x9000, scoped, tag = 'internal scratch']
  %s0 = inlined_call_operand.hbm [shape: f32[2,8,32], index: 0, kind: input, shape index: {}]
  %s1 = inlined_call_operand.hbm [shape: f32[1,32], index: 1, kind: input, shape index: {}]
  %s2 = inlined_call_operand.vmem [shape: f32[1,32], index: 2, kind: input, shape index: {}]
  %s3 = inlined_call_operand.hbm [shape: f32[8,32,48], index: 3, kind: input, shape index: {}]
  %s4 = inlined_call_operand.hbm [shape: f32[8,16,32], index: 4, kind: input, shape index: {}]
  %s5 = inlined_call_operand.vmem [shape: f32[1,32], index: 5, kind: input, shape index: {}]
  %s6 = inlined_call_operand.hbm [shape: f32[2,8,32], index: 6, kind: output, shape index: {}]
  %s7 = sld [smem:[#allocation0]]
  $region50: #{tpu_custom_call.1} parent=0
    _
  %s9 = ssub.s32 1, %s7
  %s10 = scalar_select 0, %s9, %s7
  $region1: #{tpu_custom_call.1} parent=0
    #allocation2 [shape = 'u8[8192]{0}', space=vmem, size = 0x2000, scoped, tag = 'input window, operand 0, single buffered']
    #allocation3 [shape = 's32[1]{0}', space=sflag, size = 0x4, scoped, tag = 'scoped memory for tpu_custom_call.1']
    #allocation4 [shape = 's32[1]{0}', space=sflag, size = 0x4, scoped, tag = 'scoped memory for tpu_custom_call.1']
    #allocation5 [shape = 'u8[512]{0}', space=vmem, size = 0x400, scoped, tag = 'input window, operand 1, single buffered']
    #allocation6 [shape = 's32[1]{0}', space=sflag, size = 0x4, scoped, tag = 'scoped memory for tpu_custom_call.1']
    #allocation7 [shape = 'u8[131072]{0}', space=vmem, size = 0x20000, scoped, tag = 'input window, operand 3, single buffered']
    #allocation8 [shape = 'u8[65536]{0}', space=vmem, size = 0x10000, scoped, tag = 'input window, operand 4, single buffered']
    #allocation9 [shape = 's32[1]{0}', space=sflag, size = 0x4, scoped, tag = 'scoped memory for tpu_custom_call.1']
    #allocation10 [shape = 'u8[8192]{0}', space=vmem, size = 0x2000, scoped, tag = 'output window, operand 0, single buffered']
    %11 = vsyncpa [#allocation3], 0
    %12 = vsyncpa [#allocation6], 0
    %13 = vsyncpa [#allocation9], 0
    %14 = vsyncpa [#allocation4], 0
    // Predicated region
    $region2: #{tpu_custom_call.1} parent=1 // pred_check
      _
    $region3: #{tpu_custom_call.1} parent=1 // pred_check_branch
      %16 = sbr.rel (0) target = $region5
    $region4: #{tpu_custom_call.1} parent=1 // pred_region
      %18 = vsyncadd [#allocation3], 0
      %s19 = sshll.u32 %s0, 4
      %s20 = int_to_ptr.hbm [resolvable:$true] %s19
      %s21 = sshll.u32 [#allocation2], 4
      %s22 = int_to_ptr.vmem [resolvable:$true] %s21
      %27 = dma.hbm_to_vmem [thread:$0]  %s20, 256, %s22, [#allocation3], 128, 128, 8
    $region5: #{tpu_custom_call.1} parent=1 // pred_fallthru
      _
    // Predicated region
    $region6: #{tpu_custom_call.1} parent=1 // pred_check
      _
    $region7: #{tpu_custom_call.1} parent=1 // pred_check_branch
      %29 = sbr.rel (0) target = $region9
    $region8: #{tpu_custom_call.1} parent=1 // pred_region
      %31 = vsyncadd [#allocation6], 0
      %s33 = sshll.u32 %s1, 4
      %s34 = int_to_ptr.hbm [resolvable:$true] %s33
      %s35 = sshll.u32 [#allocation5], 4
      %s36 = int_to_ptr.vmem [resolvable:$true] %s35
      %38 = dma.hbm_to_vmem [thread:$0]  %s34, 16, %s36, [#allocation6]
    $region9: #{tpu_custom_call.1} parent=1 // pred_fallthru
      _
    // Predicated region
    $region10: #{tpu_custom_call.1} parent=1 // pred_check
      _
    $region11: #{tpu_custom_call.1} parent=1 // pred_check_branch
      %40 = sbr.rel (0) target = $region13
    $region12: #{tpu_custom_call.1} parent=1 // pred_region
      _
    $region13: #{tpu_custom_call.1} parent=1 // pred_fallthru
      _
    // Predicated region
    $region14: #{tpu_custom_call.1} parent=1 // pred_check
      _
    $region15: #{tpu_custom_call.1} parent=1 // pred_check_branch
      %42 = sbr.rel (0) target = $region17
    $region16: #{tpu_custom_call.1} parent=1 // pred_region
      %44 = vsyncadd [#allocation6], 0
      %s45 = sshll.u32 %s3, 4
      %s46 = int_to_ptr.hbm [resolvable:$true] %s45
      %s47 = sshll.u32 [#allocation7], 4
      %s48 = int_to_ptr.vmem [resolvable:$true] %s47
      %53 = dma.hbm_to_vmem [thread:$0]  %s46, 4096, %s48, [#allocation6], 128, 128, 8
    $region17: #{tpu_custom_call.1} parent=1 // pred_fallthru
      _
    // Predicated region
    $region18: #{tpu_custom_call.1} parent=1 // pred_check
      _
    $region19: #{tpu_custom_call.1} parent=1 // pred_check_branch
      %55 = sbr.rel (0) target = $region21
    $region20: #{tpu_custom_call.1} parent=1 // pred_region
      %57 = vsyncadd [#allocation9], 0
      %s58 = sshll.u32 %s4, 4
      %s59 = int_to_ptr.hbm [resolvable:$true] %s58
      %s60 = sshll.u32 [#allocation8], 4
      %s61 = int_to_ptr.vmem [resolvable:$true] %s60
      %66 = dma.hbm_to_vmem [thread:$0]  %s59, 2048, %s61, [#allocation9], 128, 128, 8
    $region21: #{tpu_custom_call.1} parent=1 // pred_fallthru
      _
    // Predicated region
    $region22: #{tpu_custom_call.1} parent=1 // pred_check
      _
    $region23: #{tpu_custom_call.1} parent=1 // pred_check_branch
      %68 = sbr.rel (0) target = $region25
    $region24: #{tpu_custom_call.1} parent=1 // pred_region
      _
    $region25: #{tpu_custom_call.1} parent=1 // pred_fallthru
      _
    // Predicated region
    $region26: #{tpu_custom_call.1} parent=1 // pred_check
      _
    $region27: #{tpu_custom_call.1} parent=1 // pred_check_branch
      %70 = sbr.rel (0) target = $region29
    $region28: #{tpu_custom_call.1} parent=1 // pred_region
      %72 = dma.done [#allocation3], 256
    $region29: #{tpu_custom_call.1} parent=1 // pred_fallthru
      _
    // Predicated region
    $region30: #{tpu_custom_call.1} parent=1 // pred_check
      _
    $region31: #{tpu_custom_call.1} parent=1 // pred_check_branch
      %74 = sbr.rel (0) target = $region33
    $region32: #{tpu_custom_call.1} parent=1 // pred_region
      %76 = dma.done [#allocation6], 16
    $region33: #{tpu_custom_call.1} parent=1 // pred_fallthru
      _
    // Predicated region
    $region34: #{tpu_custom_call.1} parent=1 // pred_check
      _
    $region35: #{tpu_custom_call.1} parent=1 // pred_check_branch
      %78 = sbr.rel (0) target = $region37
    $region36: #{tpu_custom_call.1} parent=1 // pred_region
      %80 = dma.done [#allocation6], 4096
    $region37: #{tpu_custom_call.1} parent=1 // pred_fallthru
      _
    // Predicated region
    $region38: #{tpu_custom_call.1} parent=1 // pred_check
      _
    $region39: #{tpu_custom_call.1} parent=1 // pred_check_branch
      %82 = sbr.rel (0) target = $region41
    $region40: #{tpu_custom_call.1} parent=1 // pred_region
      %84 = dma.done [#allocation9], 2048
    $region41: #{tpu_custom_call.1} parent=1 // pred_fallthru
      _
    %v85 = vld [vmem:[#allocation2] sm:$0xff]
    %v86 = vld [vmem:[#allocation2 + $0x8] sm:$0xff]
    %vm87 = vcmask 261120
    %v88 = vsel %vm87, %v85, 0.0
    %89 = vadd.xlane.f32.xlu0 %v88
    %v90 = vpop.xlane.xlu0 %89
    %v91 = vsel %vm87, %v86, 0.0
    %92 = vadd.xlane.f32.xlu0 %v91
    %v93 = vpop.xlane.xlu0 %92
    %v94 = vrcp.pop 32.0
    %v95 = vmul.f32 32.0, %v94
    %v96 = vsub.f32 1.0, %v95
    %v97 = vmul.f32 %v94, %v96
    %v98 = vadd.f32 %v94, %v97
    %vm99 = vweird.f32 %v94
    %v100 = vsel %vm99, %v94, %v98
    %v101 = vmul.f32 %v90, %v100
    %v102 = vmul.f32 %v93, %v100
    %v103 = vsub.f32 %v85, %v101
    %v104 = vsub.f32 %v86, %v102
    %v105 = vmul.f32 %v103, %v103
    %v106 = vmul.f32 %v104, %v104
    %v107 = vsel %vm87, %v105, 0.0
    %108 = vadd.xlane.f32.xlu0 %v107
    %v109 = vpop.xlane.xlu0 %108
    %v110 = vsel %vm87, %v106, 0.0
    %111 = vadd.xlane.f32.xlu0 %v110
    %v112 = vpop.xlane.xlu0 %111
    %v113 = vmul.f32 %v109, %v100
    %v114 = vmul.f32 %v112, %v100
    %v115 = vadd.f32 %v113, 1e-05
    %v116 = vadd.f32 %v114, 1e-05
    %v117 = vrsqrt.pop %v115
    %v118 = vmul.f32 %v117, %v115
    %v119 = vmul.f32 %v118, %v117
    %v120 = vmul.f32 0.5, %v119
    %v121 = vsub.f32 1.5, %v120
    %v122 = vmul.f32 %v117, %v121
    %vm123 = vweird.f32 %v115
    %vm124 = vweird.f32 %v117
    %vm125 = vmor %vm123, %vm124
    %v126 = vsel %vm125, %v117, %v122
    %v127 = vrsqrt.pop %v116
    %v128 = vmul.f32 %v127, %v116
    %v129 = vmul.f32 %v128, %v127
    %v130 = vmul.f32 0.5, %v129
    %v131 = vsub.f32 1.5, %v130
    %v132 = vmul.f32 %v127, %v131
    %vm133 = vweird.f32 %v116
    %vm134 = vweird.f32 %v127
    %vm135 = vmor %vm133, %vm134
    %v136 = vsel %vm135, %v127, %v132
    %v137 = vmul.f32 %v103, %v126
    %v138 = vmul.f32 %v104, %v136
    %v139 = vld [vmem:[#allocation5] sm:$0x1]
    %v141 = vperm.slane %v139, 0
    %v143 = vmul.f32 %v137, %v141
    %v144 = vmul.f32 %v138, %v141
    %v145 = vld [vmem:[%s2] sm:$0x1]
    %v147 = vperm.slane %v145, 0
    %v149 = vadd.f32 %v143, %v147
    %v150 = vadd.f32 %v144, %v147
    %v151 = vld [vmem:[#allocation7] sm:$0xff]
    %v152 = vld [vmem:[#allocation7 + $0x8] sm:$0xff]
    %v153 = vld [vmem:[#allocation7 + $0x10] sm:$0xff]
    %v154 = vld [vmem:[#allocation7 + $0x18] sm:$0xff]
    %v155 = vld [vmem:[#allocation7 + $0x20] sm:$0xff]
    %v156 = vld [vmem:[#allocation7 + $0x28] sm:$0xff]
    %v157 = vld [vmem:[#allocation7 + $0x30] sm:$0xff]
    %v158 = vld [vmem:[#allocation7 + $0x38] sm:$0xff]
    %v159 = vld [vmem:[#allocation7 + $0x40] sm:$0xff]
    %v160 = vld [vmem:[#allocation7 + $0x48] sm:$0xff]
    %v161 = vld [vmem:[#allocation7 + $0x50] sm:$0xff]
    %v162 = vld [vmem:[#allocation7 + $0x58] sm:$0xff]
    %v163 = vld [vmem:[#allocation7 + $0x60] sm:$0xff]
    %v164 = vld [vmem:[#allocation7 + $0x68] sm:$0xff]
    %v165 = vld [vmem:[#allocation7 + $0x70] sm:$0xff]
    %v166 = vld [vmem:[#allocation7 + $0x78] sm:$0xff]
    %v167 = vld [vmem:[#allocation7 + $0x80] sm:$0xff]
    %v168 = vld [vmem:[#allocation7 + $0x88] sm:$0xff]
    %v169 = vld [vmem:[#allocation7 + $0x90] sm:$0xff]
    %v170 = vld [vmem:[#allocation7 + $0x98] sm:$0xff]
    %v171 = vld [vmem:[#allocation7 + $0xa0] sm:$0xff]
    %v172 = vld [vmem:[#allocation7 + $0xa8] sm:$0xff]
    %v173 = vld [vmem:[#allocation7 + $0xb0] sm:$0xff]
    %v174 = vld [vmem:[#allocation7 + $0xb8] sm:$0xff]
    %v175 = vld [vmem:[#allocation7 + $0xc0] sm:$0xff]
    %v176 = vld [vmem:[#allocation7 + $0xc8] sm:$0xff]
    %v177 = vld [vmem:[#allocation7 + $0xd0] sm:$0xff]
    %v178 = vld [vmem:[#allocation7 + $0xd8] sm:$0xff]
    %v179 = vld [vmem:[#allocation7 + $0xe0] sm:$0xff]
    %v180 = vld [vmem:[#allocation7 + $0xe8] sm:$0xff]
    %v181 = vld [vmem:[#allocation7 + $0xf0] sm:$0xff]
    %v182 = vld [vmem:[#allocation7 + $0xf8] sm:$0xff]
    %v184 = vsel %vm87, %v149, 0
    %186 = vmatpush.msra.mxu0 0.0
    %187 = vmatpush.msra.mxu0 0.0
    %188 = vmatpush.msra.mxu0 0.0
    %189 = vmatpush.msra.mxu0 0.0
    %190 = vmatpush.msra.mxu0 0.0
    %191 = vmatpush.msra.mxu0 0.0
    %192 = vmatpush.msra.mxu0 0.0
    %193 = vmatpush.msra.mxu0 0.0
    %194 = vmatpush.msra.mxu0 0.0
    %195 = vmatpush.msra.mxu0 0.0
    %196 = vmatpush.msra.mxu0 0.0
    %197 = vmatpush.msra.mxu0 0.0
    %198 = vmatpush.msra.mxu0 %v154
    %199 = vmatpush.msra.mxu0 %v153
    %200 = vmatpush.msra.mxu0 %v152
    %201 = vmatpush.msra.mxu0 %v151
    %202 = vmatmul.f32.gmra.mxu0 %v184
    %v203 = vpop.f32.mrf.mxu0
    %v204 = vadd.f32 0.0, %v203
    %205 = vdwg.mxu0
    %206 = vmatpush.msra.mxu0 0.0
    %207 = vmatpush.msra.mxu0 0.0
    %208 = vmatpush.msra.mxu0 0.0
    %209 = vmatpush.msra.mxu0 0.0
    %210 = vmatpush.msra.mxu0 0.0
    %211 = vmatpush.msra.mxu0 0.0
    %212 = vmatpush.msra.mxu0 0.0
    %213 = vmatpush.msra.mxu0 0.0
    %214 = vmatpush.msra.mxu0 0.0
    %215 = vmatpush.msra.mxu0 0.0
    %216 = vmatpush.msra.mxu0 0.0
    %217 = vmatpush.msra.mxu0 0.0
    %218 = vmatpush.msra.mxu0 %v158
    %219 = vmatpush.msra.mxu0 %v157
    %220 = vmatpush.msra.mxu0 %v156
    %221 = vmatpush.msra.mxu0 %v155
    %222 = vmatmul.f32.gmra.mxu0 %v184
    %v223 = vpop.f32.mrf.mxu0
    %v224 = vadd.f32 0.0, %v223
    %225 = vdwg.mxu0
    %226 = vmatpush.msra.mxu0 0.0
    %227 = vmatpush.msra.mxu0 0.0
    %228 = vmatpush.msra.mxu0 0.0
    %229 = vmatpush.msra.mxu0 0.0
    %230 = vmatpush.msra.mxu0 0.0
    %231 = vmatpush.msra.mxu0 0.0
    %232 = vmatpush.msra.mxu0 0.0
    %233 = vmatpush.msra.mxu0 0.0
    %234 = vmatpush.msra.mxu0 0.0
    %235 = vmatpush.msra.mxu0 0.0
    %236 = vmatpush.msra.mxu0 0.0
    %237 = vmatpush.msra.mxu0 0.0
    %238 = vmatpush.msra.mxu0 %v162
    %239 = vmatpush.msra.mxu0 %v161
    %240 = vmatpush.msra.mxu0 %v160
    %241 = vmatpush.msra.mxu0 %v159
    %242 = vmatmul.f32.gmra.mxu0 %v184
    %v243 = vpop.f32.mrf.mxu0
    %v244 = vadd.f32 0.0, %v243
    %245 = vdwg.mxu0
    %246 = vmatpush.msra.mxu0 0.0
    %247 = vmatpush.msra.mxu0 0.0
    %248 = vmatpush.msra.mxu0 0.0
    %249 = vmatpush.msra.mxu0 0.0
    %250 = vmatpush.msra.mxu0 0.0
    %251 = vmatpush.msra.mxu0 0.0
    %252 = vmatpush.msra.mxu0 0.0
    %253 = vmatpush.msra.mxu0 0.0
    %254 = vmatpush.msra.mxu0 0.0
    %255 = vmatpush.msra.mxu0 0.0
    %256 = vmatpush.msra.mxu0 0.0
    %257 = vmatpush.msra.mxu0 0.0
    %258 = vmatpush.msra.mxu0 %v166
    %259 = vmatpush.msra.mxu0 %v165
    %260 = vmatpush.msra.mxu0 %v164
    %261 = vmatpush.msra.mxu0 %v163
    %262 = vmatmul.f32.gmra.mxu0 %v184
    %v263 = vpop.f32.mrf.mxu0
    %v264 = vadd.f32 0.0, %v263
    %265 = vdwg.mxu0
    %v267 = vsel %vm87, %v150, 0
    %269 = vmatpush.msra.mxu0 0.0
    %270 = vmatpush.msra.mxu0 0.0
    %271 = vmatpush.msra.mxu0 0.0
    %272 = vmatpush.msra.mxu0 0.0
    %273 = vmatpush.msra.mxu0 0.0
    %274 = vmatpush.msra.mxu0 0.0
    %275 = vmatpush.msra.mxu0 0.0
    %276 = vmatpush.msra.mxu0 0.0
    %277 = vmatpush.msra.mxu0 0.0
    %278 = vmatpush.msra.mxu0 0.0
    %279 = vmatpush.msra.mxu0 0.0
    %280 = vmatpush.msra.mxu0 0.0
    %281 = vmatpush.msra.mxu0 %v170
    %282 = vmatpush.msra.mxu0 %v169
    %283 = vmatpush.msra.mxu0 %v168
    %284 = vmatpush.msra.mxu0 %v167
    %285 = vmatmul.f32.gmra.mxu0 %v267
    %v286 = vpop.f32.mrf.mxu0
    %v287 = vadd.f32 0.0, %v286
    %288 = vdwg.mxu0
    %289 = vmatpush.msra.mxu0 0.0
    %290 = vmatpush.msra.mxu0 0.0
    %291 = vmatpush.msra.mxu0 0.0
    %292 = vmatpush.msra.mxu0 0.0
    %293 = vmatpush.msra.mxu0 0.0
    %294 = vmatpush.msra.mxu0 0.0
    %295 = vmatpush.msra.mxu0 0.0
    %296 = vmatpush.msra.mxu0 0.0
    %297 = vmatpush.msra.mxu0 0.0
    %298 = vmatpush.msra.mxu0 0.0
    %299 = vmatpush.msra.mxu0 0.0
    %300 = vmatpush.msra.mxu0 0.0
    %301 = vmatpush.msra.mxu0 %v174
    %302 = vmatpush.msra.mxu0 %v173
    %303 = vmatpush.msra.mxu0 %v172
    %304 = vmatpush.msra.mxu0 %v171
    %305 = vmatmul.f32.gmra.mxu0 %v267
    %v306 = vpop.f32.mrf.mxu0
    %v307 = vadd.f32 0.0, %v306
    %308 = vdwg.mxu0
    %309 = vmatpush.msra.mxu0 0.0
    %310 = vmatpush.msra.mxu0 0.0
    %311 = vmatpush.msra.mxu0 0.0
    %312 = vmatpush.msra.mxu0 0.0
    %313 = vmatpush.msra.mxu0 0.0
    %314 = vmatpush.msra.mxu0 0.0
    %315 = vmatpush.msra.mxu0 0.0
    %316 = vmatpush.msra.mxu0 0.0
    %317 = vmatpush.msra.mxu0 0.0
    %318 = vmatpush.msra.mxu0 0.0
    %319 = vmatpush.msra.mxu0 0.0
    %320 = vmatpush.msra.mxu0 0.0
    %321 = vmatpush.msra.mxu0 %v178
    %322 = vmatpush.msra.mxu0 %v177
    %323 = vmatpush.msra.mxu0 %v176
    %324 = vmatpush.msra.mxu0 %v175
    %325 = vmatmul.f32.gmra.mxu0 %v267
    %v326 = vpop.f32.mrf.mxu0
    %v327 = vadd.f32 0.0, %v326
    %328 = vdwg.mxu0
    %329 = vmatpush.msra.mxu0 0.0
    %330 = vmatpush.msra.mxu0 0.0
    %331 = vmatpush.msra.mxu0 0.0
    %332 = vmatpush.msra.mxu0 0.0
    %333 = vmatpush.msra.mxu0 0.0
    %334 = vmatpush.msra.mxu0 0.0
    %335 = vmatpush.msra.mxu0 0.0
    %336 = vmatpush.msra.mxu0 0.0
    %337 = vmatpush.msra.mxu0 0.0
    %338 = vmatpush.msra.mxu0 0.0
    %339 = vmatpush.msra.mxu0 0.0
    %340 = vmatpush.msra.mxu0 0.0
    %341 = vmatpush.msra.mxu0 %v182
    %342 = vmatpush.msra.mxu0 %v181
    %343 = vmatpush.msra.mxu0 %v180
    %344 = vmatpush.msra.mxu0 %v179
    %345 = vmatmul.f32.gmra.mxu0 %v267
    %v346 = vpop.f32.mrf.mxu0
    %v347 = vadd.f32 0.0, %v346
    %348 = vdwg.mxu0
    %350 = vrot.lane.b32.xlu0 %v204, 112
    %v351 = vpop.permute.xlu0 %350
    %vm352 = vcmask 130048
    %v353 = vsel %vm352, %v204, 0
    %v355 = vsel %vm352, %v351, 0
    %357 = vmatpush.xpose.msra.mxu0 0.0
    %358 = vmatpush.xpose.msra.mxu0 0.0
    %359 = vmatpush.xpose.msra.mxu0 0.0
    %360 = vmatpush.xpose.msra.mxu0 0.0
    %361 = vmatpush.xpose.msra.mxu0 0.0
    %362 = vmatpush.xpose.msra.mxu0 0.0
    %363 = vmatpush.xpose.msra.mxu0 0.0
    %364 = vmatpush.xpose.msra.mxu0 0.0
    %365 = vmatpush.xpose.msra.mxu0 0.0
    %366 = vmatpush.xpose.msra.mxu0 0.0
    %367 = vmatpush.xpose.msra.mxu0 0.0
    %368 = vmatpush.xpose.msra.mxu0 0.0
    %369 = vmatpush.xpose.msra.mxu0 0.0
    %370 = vmatpush.xpose.msra.mxu0 0.0
    %371 = vmatpush.xpose.msra.mxu0 0.0
    %372 = vmatpush.xpose.msra.mxu0 %v355
    %373 = vmatmul.f32.gmra.mxu0 %v353
    %v374 = vpop.f32.mrf.mxu0
    %v375 = vadd.f32 0.0, %v374
    %376 = vdwg.mxu0
    %378 = vrot.lane.b32.xlu0 %v224, 112
    %v379 = vpop.permute.xlu0 %378
    %v380 = vsel %vm352, %v224, 0
    %v382 = vsel %vm352, %v379, 0
    %384 = vmatpush.xpose.msra.mxu0 0.0
    %385 = vmatpush.xpose.msra.mxu0 0.0
    %386 = vmatpush.xpose.msra.mxu0 0.0
    %387 = vmatpush.xpose.msra.mxu0 0.0
    %388 = vmatpush.xpose.msra.mxu0 0.0
    %389 = vmatpush.xpose.msra.mxu0 0.0
    %390 = vmatpush.xpose.msra.mxu0 0.0
    %391 = vmatpush.xpose.msra.mxu0 0.0
    %392 = vmatpush.xpose.msra.mxu0 0.0
    %393 = vmatpush.xpose.msra.mxu0 0.0
    %394 = vmatpush.xpose.msra.mxu0 0.0
    %395 = vmatpush.xpose.msra.mxu0 0.0
    %396 = vmatpush.xpose.msra.mxu0 0.0
    %397 = vmatpush.xpose.msra.mxu0 0.0
    %398 = vmatpush.xpose.msra.mxu0 0.0
    %399 = vmatpush.xpose.msra.mxu0 %v382
    %400 = vmatmul.f32.gmra.mxu0 %v380
    %v401 = vpop.f32.mrf.mxu0
    %v402 = vadd.f32 0.0, %v401
    %403 = vdwg.mxu0
    %405 = vrot.lane.b32.xlu0 %v244, 112
    %v406 = vpop.permute.xlu0 %405
    %v407 = vsel %vm352, %v244, 0
    %v409 = vsel %vm352, %v406, 0
    %411 = vmatpush.xpose.msra.mxu0 0.0
    %412 = vmatpush.xpose.msra.mxu0 0.0
    %413 = vmatpush.xpose.msra.mxu0 0.0
    %414 = vmatpush.xpose.msra.mxu0 0.0
    %415 = vmatpush.xpose.msra.mxu0 0.0
    %416 = vmatpush.xpose.msra.mxu0 0.0
    %417 = vmatpush.xpose.msra.mxu0 0.0
    %418 = vmatpush.xpose.msra.mxu0 0.0
    %419 = vmatpush.xpose.msra.mxu0 0.0
    %420 = vmatpush.xpose.msra.mxu0 0.0
    %421 = vmatpush.xpose.msra.mxu0 0.0
    %422 = vmatpush.xpose.msra.mxu0 0.0
    %423 = vmatpush.xpose.msra.mxu0 0.0
    %424 = vmatpush.xpose.msra.mxu0 0.0
    %425 = vmatpush.xpose.msra.mxu0 0.0
    %426 = vmatpush.xpose.msra.mxu0 %v409
    %427 = vmatmul.f32.gmra.mxu0 %v407
    %v428 = vpop.f32.mrf.mxu0
    %v429 = vadd.f32 0.0, %v428
    %430 = vdwg.mxu0
    %432 = vrot.lane.b32.xlu0 %v264, 112
    %v433 = vpop.permute.xlu0 %432
    %v434 = vsel %vm352, %v264, 0
    %v436 = vsel %vm352, %v433, 0
    %438 = vmatpush.xpose.msra.mxu0 0.0
    %439 = vmatpush.xpose.msra.mxu0 0.0
    %440 = vmatpush.xpose.msra.mxu0 0.0
    %441 = vmatpush.xpose.msra.mxu0 0.0
    %442 = vmatpush.xpose.msra.mxu0 0.0
    %443 = vmatpush.xpose.msra.mxu0 0.0
    %444 = vmatpush.xpose.msra.mxu0 0.0
    %445 = vmatpush.xpose.msra.mxu0 0.0
    %446 = vmatpush.xpose.msra.mxu0 0.0
    %447 = vmatpush.xpose.msra.mxu0 0.0
    %448 = vmatpush.xpose.msra.mxu0 0.0
    %449 = vmatpush.xpose.msra.mxu0 0.0
    %450 = vmatpush.xpose.msra.mxu0 0.0
    %451 = vmatpush.xpose.msra.mxu0 0.0
    %452 = vmatpush.xpose.msra.mxu0 0.0
    %453 = vmatpush.xpose.msra.mxu0 %v436
    %454 = vmatmul.f32.gmra.mxu0 %v434
    %v455 = vpop.f32.mrf.mxu0
    %v456 = vadd.f32 0.0, %v455
    %457 = vdwg.mxu0
    %459 = vrot.lane.b32.xlu0 %v287, 112
    %v460 = vpop.permute.xlu0 %459
    %v461 = vsel %vm352, %v287, 0
    %v463 = vsel %vm352, %v460, 0
    %465 = vmatpush.xpose.msra.mxu0 0.0
    %466 = vmatpush.xpose.msra.mxu0 0.0
    %467 = vmatpush.xpose.msra.mxu0 0.0
    %468 = vmatpush.xpose.msra.mxu0 0.0
    %469 = vmatpush.xpose.msra.mxu0 0.0
    %470 = vmatpush.xpose.msra.mxu0 0.0
    %471 = vmatpush.xpose.msra.mxu0 0.0
    %472 = vmatpush.xpose.msra.mxu0 0.0
    %473 = vmatpush.xpose.msra.mxu0 0.0
    %474 = vmatpush.xpose.msra.mxu0 0.0
    %475 = vmatpush.xpose.msra.mxu0 0.0
    %476 = vmatpush.xpose.msra.mxu0 0.0
    %477 = vmatpush.xpose.msra.mxu0 0.0
    %478 = vmatpush.xpose.msra.mxu0 0.0
    %479 = vmatpush.xpose.msra.mxu0 0.0
    %480 = vmatpush.xpose.msra.mxu0 %v463
    %481 = vmatmul.f32.gmra.mxu0 %v461
    %v482 = vpop.f32.mrf.mxu0
    %v483 = vadd.f32 0.0, %v482
    %484 = vdwg.mxu0
    %486 = vrot.lane.b32.xlu0 %v307, 112
    %v487 = vpop.permute.xlu0 %486
    %v488 = vsel %vm352, %v307, 0
    %v490 = vsel %vm352, %v487, 0
    %492 = vmatpush.xpose.msra.mxu0 0.0
    %493 = vmatpush.xpose.msra.mxu0 0.0
    %494 = vmatpush.xpose.msra.mxu0 0.0
    %495 = vmatpush.xpose.msra.mxu0 0.0
    %496 = vmatpush.xpose.msra.mxu0 0.0
    %497 = vmatpush.xpose.msra.mxu0 0.0
    %498 = vmatpush.xpose.msra.mxu0 0.0
    %499 = vmatpush.xpose.msra.mxu0 0.0
    %500 = vmatpush.xpose.msra.mxu0 0.0
    %501 = vmatpush.xpose.msra.mxu0 0.0
    %502 = vmatpush.xpose.msra.mxu0 0.0
    %503 = vmatpush.xpose.msra.mxu0 0.0
    %504 = vmatpush.xpose.msra.mxu0 0.0
    %505 = vmatpush.xpose.msra.mxu0 0.0
    %506 = vmatpush.xpose.msra.mxu0 0.0
    %507 = vmatpush.xpose.msra.mxu0 %v490
    %508 = vmatmul.f32.gmra.mxu0 %v488
    %v509 = vpop.f32.mrf.mxu0
    %v510 = vadd.f32 0.0, %v509
    %511 = vdwg.mxu0
    %513 = vrot.lane.b32.xlu0 %v327, 112
    %v514 = vpop.permute.xlu0 %513
    %v515 = vsel %vm352, %v327, 0
    %v517 = vsel %vm352, %v514, 0
    %519 = vmatpush.xpose.msra.mxu0 0.0
    %520 = vmatpush.xpose.msra.mxu0 0.0
    %521 = vmatpush.xpose.msra.mxu0 0.0
    %522 = vmatpush.xpose.msra.mxu0 0.0
    %523 = vmatpush.xpose.msra.mxu0 0.0
    %524 = vmatpush.xpose.msra.mxu0 0.0
    %525 = vmatpush.xpose.msra.mxu0 0.0
    %526 = vmatpush.xpose.msra.mxu0 0.0
    %527 = vmatpush.xpose.msra.mxu0 0.0
    %528 = vmatpush.xpose.msra.mxu0 0.0
    %529 = vmatpush.xpose.msra.mxu0 0.0
    %530 = vmatpush.xpose.msra.mxu0 0.0
    %531 = vmatpush.xpose.msra.mxu0 0.0
    %532 = vmatpush.xpose.msra.mxu0 0.0
    %533 = vmatpush.xpose.msra.mxu0 0.0
    %534 = vmatpush.xpose.msra.mxu0 %v517
    %535 = vmatmul.f32.gmra.mxu0 %v515
    %v536 = vpop.f32.mrf.mxu0
    %v537 = vadd.f32 0.0, %v536
    %538 = vdwg.mxu0
    %540 = vrot.lane.b32.xlu0 %v347, 112
    %v541 = vpop.permute.xlu0 %540
    %v542 = vsel %vm352, %v347, 0
    %v544 = vsel %vm352, %v541, 0
    %546 = vmatpush.xpose.msra.mxu0 0.0
    %547 = vmatpush.xpose.msra.mxu0 0.0
    %548 = vmatpush.xpose.msra.mxu0 0.0
    %549 = vmatpush.xpose.msra.mxu0 0.0
    %550 = vmatpush.xpose.msra.mxu0 0.0
    %551 = vmatpush.xpose.msra.mxu0 0.0
    %552 = vmatpush.xpose.msra.mxu0 0.0
    %553 = vmatpush.xpose.msra.mxu0 0.0
    %554 = vmatpush.xpose.msra.mxu0 0.0
    %555 = vmatpush.xpose.msra.mxu0 0.0
    %556 = vmatpush.xpose.msra.mxu0 0.0
    %557 = vmatpush.xpose.msra.mxu0 0.0
    %558 = vmatpush.xpose.msra.mxu0 0.0
    %559 = vmatpush.xpose.msra.mxu0 0.0
    %560 = vmatpush.xpose.msra.mxu0 0.0
    %561 = vmatpush.xpose.msra.mxu0 %v544
    %562 = vmatmul.f32.gmra.mxu0 %v542
    %v563 = vpop.f32.mrf.mxu0
    %v564 = vadd.f32 0.0, %v563
    %565 = vdwg.mxu0
    %vm566 = vcmask 64512
    %v567 = vsel %vm566, %v375, -inf
    %568 = vmax.xlane.f32.xlu0 %v567
    %v569 = vpop.xlane.xlu0 %568
    %v570 = vsel %vm566, %v402, -inf
    %571 = vmax.xlane.f32.xlu0 %v570
    %v572 = vpop.xlane.xlu0 %571
    %v573 = vsel %vm566, %v429, -inf
    %574 = vmax.xlane.f32.xlu0 %v573
    %v575 = vpop.xlane.xlu0 %574
    %v576 = vsel %vm566, %v456, -inf
    %577 = vmax.xlane.f32.xlu0 %v576
    %v578 = vpop.xlane.xlu0 %577
    %v579 = vsel %vm566, %v483, -inf
    %580 = vmax.xlane.f32.xlu0 %v579
    %v581 = vpop.xlane.xlu0 %580
    %v582 = vsel %vm566, %v510, -inf
    %583 = vmax.xlane.f32.xlu0 %v582
    %v584 = vpop.xlane.xlu0 %583
    %v585 = vsel %vm566, %v537, -inf
    %586 = vmax.xlane.f32.xlu0 %v585
    %v587 = vpop.xlane.xlu0 %586
    %v588 = vsel %vm566, %v564, -inf
    %589 = vmax.xlane.f32.xlu0 %v588
    %v590 = vpop.xlane.xlu0 %589
    %v591 = vsub.f32 %v375, %v569
    %v592 = vsub.f32 %v402, %v572
    %v593 = vsub.f32 %v429, %v575
    %v594 = vsub.f32 %v456, %v578
    %v595 = vsub.f32 %v483, %v581
    %v596 = vsub.f32 %v510, %v584
    %v597 = vsub.f32 %v537, %v587
    %v598 = vsub.f32 %v564, %v590
    %v599 = vmul.f32 %v591, 1.442695
    %v600 = vpow.pop %v599
    %v601 = vmul.f32 %v592, 1.442695
    %v602 = vpow.pop %v601
    %v603 = vmul.f32 %v593, 1.442695
    %v604 = vpow.pop %v603
    %v605 = vmul.f32 %v594, 1.442695
    %v606 = vpow.pop %v605
    %v607 = vmul.f32 %v595, 1.442695
    %v608 = vpow.pop %v607
    %v609 = vmul.f32 %v596, 1.442695
    %v610 = vpow.pop %v609
    %v611 = vmul.f32 %v597, 1.442695
    %v612 = vpow.pop %v611
    %v613 = vmul.f32 %v598, 1.442695
    %v614 = vpow.pop %v613
    %v615 = vsel %vm566, %v600, 0.0
    %616 = vadd.xlane.f32.xlu0 %v615
    %v617 = vpop.xlane.xlu0 %616
    %v618 = vsel %vm566, %v602, 0.0
    %619 = vadd.xlane.f32.xlu0 %v618
    %v620 = vpop.xlane.xlu0 %619
    %v621 = vsel %vm566, %v604, 0.0
    %622 = vadd.xlane.f32.xlu0 %v621
    %v623 = vpop.xlane.xlu0 %622
    %v624 = vsel %vm566, %v606, 0.0
    %625 = vadd.xlane.f32.xlu0 %v624
    %v626 = vpop.xlane.xlu0 %625
    %v627 = vsel %vm566, %v608, 0.0
    %628 = vadd.xlane.f32.xlu0 %v627
    %v629 = vpop.xlane.xlu0 %628
    %v630 = vsel %vm566, %v610, 0.0
    %631 = vadd.xlane.f32.xlu0 %v630
    %v632 = vpop.xlane.xlu0 %631
    %v633 = vsel %vm566, %v612, 0.0
    %634 = vadd.xlane.f32.xlu0 %v633
    %v635 = vpop.xlane.xlu0 %634
    %v636 = vsel %vm566, %v614, 0.0
    %637 = vadd.xlane.f32.xlu0 %v636
    %v638 = vpop.xlane.xlu0 %637
    %v639 = vrcp.pop %v617
    %v640 = vrcp.pop %v620
    %v641 = vrcp.pop %v623
    %v642 = vrcp.pop %v626
    %v643 = vrcp.pop %v629
    %v644 = vrcp.pop %v632
    %v645 = vrcp.pop %v635
    %v646 = vrcp.pop %v638
    %v647 = vmul.f32 %v600, %v639
    %v648 = vmul.f32 %v602, %v640
    %v649 = vmul.f32 %v604, %v641
    %v650 = vmul.f32 %v606, %v642
    %v651 = vmul.f32 %v608, %v643
    %v652 = vmul.f32 %v610, %v644
    %v653 = vmul.f32 %v612, %v645
    %v654 = vmul.f32 %v614, %v646
    %655 = vrot.lane.b32.xlu0 %v204, 96
    %v656 = vpop.permute.xlu0 %655
    %v659 = vsel %vm566, %v647, 0
    %661 = vmatpush.msra.mxu0 0.0
    %662 = vmatpush.msra.mxu0 0.0
    %663 = vmatpush.msra.mxu0 0.0
    %664 = vmatpush.msra.mxu0 0.0
    %665 = vmatpush.msra.mxu0 0.0
    %666 = vmatpush.msra.mxu0 0.0
    %667 = vmatpush.msra.mxu0 0.0
    %668 = vmatpush.msra.mxu0 0.0
    %669 = vmatpush.msra.mxu0 0.0
    %670 = vmatpush.msra.mxu0 0.0
    %671 = vmatpush.msra.mxu0 0.0
    %672 = vmatpush.msra.mxu0 0.0
    %673 = vmatpush.msra.mxu0 0.0
    %674 = vmatpush.msra.mxu0 0.0
    %675 = vmatpush.msra.mxu0 0.0
    %676 = vmatpush.msra.mxu0 %v656
    %677 = vmatmul.f32.gmra.mxu0 %v659
    %v678 = vpop.f32.mrf.mxu0
    %v679 = vadd.f32 0.0, %v678
    %680 = vdwg.mxu0
    %681 = vrot.lane.b32.xlu0 %v224, 96
    %v682 = vpop.permute.xlu0 %681
    %v685 = vsel %vm566, %v648, 0
    %687 = vmatpush.msra.mxu0 0.0
    %688 = vmatpush.msra.mxu0 0.0
    %689 = vmatpush.msra.mxu0 0.0
    %690 = vmatpush.msra.mxu0 0.0
    %691 = vmatpush.msra.mxu0 0.0
    %692 = vmatpush.msra.mxu0 0.0
    %693 = vmatpush.msra.mxu0 0.0
    %694 = vmatpush.msra.mxu0 0.0
    %695 = vmatpush.msra.mxu0 0.0
    %696 = vmatpush.msra.mxu0 0.0
    %697 = vmatpush.msra.mxu0 0.0
    %698 = vmatpush.msra.mxu0 0.0
    %699 = vmatpush.msra.mxu0 0.0
    %700 = vmatpush.msra.mxu0 0.0
    %701 = vmatpush.msra.mxu0 0.0
    %702 = vmatpush.msra.mxu0 %v682
    %703 = vmatmul.f32.gmra.mxu0 %v685
    %v704 = vpop.f32.mrf.mxu0
    %v705 = vadd.f32 0.0, %v704
    %706 = vdwg.mxu0
    %707 = vrot.lane.b32.xlu0 %v244, 96
    %v708 = vpop.permute.xlu0 %707
    %v711 = vsel %vm566, %v649, 0
    %713 = vmatpush.msra.mxu0 0.0
    %714 = vmatpush.msra.mxu0 0.0
    %715 = vmatpush.msra.mxu0 0.0
    %716 = vmatpush.msra.mxu0 0.0
    %717 = vmatpush.msra.mxu0 0.0
    %718 = vmatpush.msra.mxu0 0.0
    %719 = vmatpush.msra.mxu0 0.0
    %720 = vmatpush.msra.mxu0 0.0
    %721 = vmatpush.msra.mxu0 0.0
    %722 = vmatpush.msra.mxu0 0.0
    %723 = vmatpush.msra.mxu0 0.0
    %724 = vmatpush.msra.mxu0 0.0
    %725 = vmatpush.msra.mxu0 0.0
    %726 = vmatpush.msra.mxu0 0.0
    %727 = vmatpush.msra.mxu0 0.0
    %728 = vmatpush.msra.mxu0 %v708
    %729 = vmatmul.f32.gmra.mxu0 %v711
    %v730 = vpop.f32.mrf.mxu0
    %v731 = vadd.f32 0.0, %v730
    %732 = vdwg.mxu0
    %733 = vrot.lane.b32.xlu0 %v264, 96
    %v734 = vpop.permute.xlu0 %733
    %v737 = vsel %vm566, %v650, 0
    %739 = vmatpush.msra.mxu0 0.0
    %740 = vmatpush.msra.mxu0 0.0
    %741 = vmatpush.msra.mxu0 0.0
    %742 = vmatpush.msra.mxu0 0.0
    %743 = vmatpush.msra.mxu0 0.0
    %744 = vmatpush.msra.mxu0 0.0
    %745 = vmatpush.msra.mxu0 0.0
    %746 = vmatpush.msra.mxu0 0.0
    %747 = vmatpush.msra.mxu0 0.0
    %748 = vmatpush.msra.mxu0 0.0
    %749 = vmatpush.msra.mxu0 0.0
    %750 = vmatpush.msra.mxu0 0.0
    %751 = vmatpush.msra.mxu0 0.0
    %752 = vmatpush.msra.mxu0 0.0
    %753 = vmatpush.msra.mxu0 0.0
    %754 = vmatpush.msra.mxu0 %v734
    %755 = vmatmul.f32.gmra.mxu0 %v737
    %v756 = vpop.f32.mrf.mxu0
    %v757 = vadd.f32 0.0, %v756
    %758 = vdwg.mxu0
    %759 = vrot.lane.b32.xlu0 %v287, 96
    %v760 = vpop.permute.xlu0 %759
    %v763 = vsel %vm566, %v651, 0
    %765 = vmatpush.msra.mxu0 0.0
    %766 = vmatpush.msra.mxu0 0.0
    %767 = vmatpush.msra.mxu0 0.0
    %768 = vmatpush.msra.mxu0 0.0
    %769 = vmatpush.msra.mxu0 0.0
    %770 = vmatpush.msra.mxu0 0.0
    %771 = vmatpush.msra.mxu0 0.0
    %772 = vmatpush.msra.mxu0 0.0
    %773 = vmatpush.msra.mxu0 0.0
    %774 = vmatpush.msra.mxu0 0.0
    %775 = vmatpush.msra.mxu0 0.0
    %776 = vmatpush.msra.mxu0 0.0
    %777 = vmatpush.msra.mxu0 0.0
    %778 = vmatpush.msra.mxu0 0.0
    %779 = vmatpush.msra.mxu0 0.0
    %780 = vmatpush.msra.mxu0 %v760
    %781 = vmatmul.f32.gmra.mxu0 %v763
    %v782 = vpop.f32.mrf.mxu0
    %v783 = vadd.f32 0.0, %v782
    %784 = vdwg.mxu0
    %785 = vrot.lane.b32.xlu0 %v307, 96
    %v786 = vpop.permute.xlu0 %785
    %v789 = vsel %vm566, %v652, 0
    %791 = vmatpush.msra.mxu0 0.0
    %792 = vmatpush.msra.mxu0 0.0
    %793 = vmatpush.msra.mxu0 0.0
    %794 = vmatpush.msra.mxu0 0.0
    %795 = vmatpush.msra.mxu0 0.0
    %796 = vmatpush.msra.mxu0 0.0
    %797 = vmatpush.msra.mxu0 0.0
    %798 = vmatpush.msra.mxu0 0.0
    %799 = vmatpush.msra.mxu0 0.0
    %800 = vmatpush.msra.mxu0 0.0
    %801 = vmatpush.msra.mxu0 0.0
    %802 = vmatpush.msra.mxu0 0.0
    %803 = vmatpush.msra.mxu0 0.0
    %804 = vmatpush.msra.mxu0 0.0
    %805 = vmatpush.msra.mxu0 0.0
    %806 = vmatpush.msra.mxu0 %v786
    %807 = vmatmul.f32.gmra.mxu0 %v789
    %v808 = vpop.f32.mrf.mxu0
    %v809 = vadd.f32 0.0, %v808
    %810 = vdwg.mxu0
    %811 = vrot.lane.b32.xlu0 %v327, 96
    %v812 = vpop.permute.xlu0 %811
    %v815 = vsel %vm566, %v653, 0
    %817 = vmatpush.msra.mxu0 0.0
    %818 = vmatpush.msra.mxu0 0.0
    %819 = vmatpush.msra.mxu0 0.0
    %820 = vmatpush.msra.mxu0 0.0
    %821 = vmatpush.msra.mxu0 0.0
    %822 = vmatpush.msra.mxu0 0.0
    %823 = vmatpush.msra.mxu0 0.0
    %824 = vmatpush.msra.mxu0 0.0
    %825 = vmatpush.msra.mxu0 0.0
    %826 = vmatpush.msra.mxu0 0.0
    %827 = vmatpush.msra.mxu0 0.0
    %828 = vmatpush.msra.mxu0 0.0
    %829 = vmatpush.msra.mxu0 0.0
    %830 = vmatpush.msra.mxu0 0.0
    %831 = vmatpush.msra.mxu0 0.0
    %832 = vmatpush.msra.mxu0 %v812
    %833 = vmatmul.f32.gmra.mxu0 %v815
    %v834 = vpop.f32.mrf.mxu0
    %v835 = vadd.f32 0.0, %v834
    %836 = vdwg.mxu0
    %837 = vrot.lane.b32.xlu0 %v347, 96
    %v838 = vpop.permute.xlu0 %837
    %v841 = vsel %vm566, %v654, 0
    %843 = vmatpush.msra.mxu0 0.0
    %844 = vmatpush.msra.mxu0 0.0
    %845 = vmatpush.msra.mxu0 0.0
    %846 = vmatpush.msra.mxu0 0.0
    %847 = vmatpush.msra.mxu0 0.0
    %848 = vmatpush.msra.mxu0 0.0
    %849 = vmatpush.msra.mxu0 0.0
    %850 = vmatpush.msra.mxu0 0.0
    %851 = vmatpush.msra.mxu0 0.0
    %852 = vmatpush.msra.mxu0 0.0
    %853 = vmatpush.msra.mxu0 0.0
    %854 = vmatpush.msra.mxu0 0.0
    %855 = vmatpush.msra.mxu0 0.0
    %856 = vmatpush.msra.mxu0 0.0
    %857 = vmatpush.msra.mxu0 0.0
    %858 = vmatpush.msra.mxu0 %v838
    %859 = vmatmul.f32.gmra.mxu0 %v841
    %v860 = vpop.f32.mrf.mxu0
    %v861 = vadd.f32 0.0, %v860
    %862 = vdwg.mxu0
    %v863 = vld [vmem:[#allocation8] sm:$0xff]
    %v864 = vld [vmem:[#allocation8 + $0x8] sm:$0xff]
    %v865 = vld [vmem:[#allocation8 + $0x10] sm:$0xff]
    %v866 = vld [vmem:[#allocation8 + $0x18] sm:$0xff]
    %v867 = vld [vmem:[#allocation8 + $0x20] sm:$0xff]
    %v868 = vld [vmem:[#allocation8 + $0x28] sm:$0xff]
    %v869 = vld [vmem:[#allocation8 + $0x30] sm:$0xff]
    %v870 = vld [vmem:[#allocation8 + $0x38] sm:$0xff]
    %v871 = vld [vmem:[#allocation8 + $0x40] sm:$0xff]
    %v872 = vld [vmem:[#allocation8 + $0x48] sm:$0xff]
    %v873 = vld [vmem:[#allocation8 + $0x50] sm:$0xff]
    %v874 = vld [vmem:[#allocation8 + $0x58] sm:$0xff]
    %v875 = vld [vmem:[#allocation8 + $0x60] sm:$0xff]
    %v876 = vld [vmem:[#allocation8 + $0x68] sm:$0xff]
    %v877 = vld [vmem:[#allocation8 + $0x70] sm:$0xff]
    %v878 = vld [vmem:[#allocation8 + $0x78] sm:$0xff]
    %v880 = vsel %vm352, %v679, 0
    %882 = vmatpush.msra.mxu0 0.0
    %883 = vmatpush.msra.mxu0 0.0
    %884 = vmatpush.msra.mxu0 0.0
    %885 = vmatpush.msra.mxu0 0.0
    %886 = vmatpush.msra.mxu0 0.0
    %887 = vmatpush.msra.mxu0 0.0
    %888 = vmatpush.msra.mxu0 0.0
    %889 = vmatpush.msra.mxu0 0.0
    %890 = vmatpush.msra.mxu0 0.0
    %891 = vmatpush.msra.mxu0 0.0
    %892 = vmatpush.msra.mxu0 0.0
    %893 = vmatpush.msra.mxu0 0.0
    %894 = vmatpush.msra.mxu0 0.0
    %895 = vmatpush.msra.mxu0 0.0
    %896 = vmatpush.msra.mxu0 %v864
    %897 = vmatpush.msra.mxu0 %v863
    %898 = vmatmul.f32.gmra.mxu0 %v880
    %v899 = vpop.f32.mrf.mxu0
    %v900 = vadd.f32 0.0, %v899
    %901 = vdwg.mxu0
    %v903 = vsel %vm352, %v705, 0
    %905 = vmatpush.msra.mxu0 0.0
    %906 = vmatpush.msra.mxu0 0.0
    %907 = vmatpush.msra.mxu0 0.0
    %908 = vmatpush.msra.mxu0 0.0
    %909 = vmatpush.msra.mxu0 0.0
    %910 = vmatpush.msra.mxu0 0.0
    %911 = vmatpush.msra.mxu0 0.0
    %912 = vmatpush.msra.mxu0 0.0
    %913 = vmatpush.msra.mxu0 0.0
    %914 = vmatpush.msra.mxu0 0.0
    %915 = vmatpush.msra.mxu0 0.0
    %916 = vmatpush.msra.mxu0 0.0
    %917 = vmatpush.msra.mxu0 0.0
    %918 = vmatpush.msra.mxu0 0.0
    %919 = vmatpush.msra.mxu0 %v866
    %920 = vmatpush.msra.mxu0 %v865
    %921 = vmatmul.f32.gmra.mxu0 %v903
    %v922 = vpop.f32.mrf.mxu0
    %v923 = vadd.f32 0.0, %v922
    %924 = vdwg.mxu0
    %v926 = vsel %vm352, %v731, 0
    %928 = vmatpush.msra.mxu0 0.0
    %929 = vmatpush.msra.mxu0 0.0
    %930 = vmatpush.msra.mxu0 0.0
    %931 = vmatpush.msra.mxu0 0.0
    %932 = vmatpush.msra.mxu0 0.0
    %933 = vmatpush.msra.mxu0 0.0
    %934 = vmatpush.msra.mxu0 0.0
    %935 = vmatpush.msra.mxu0 0.0
    %936 = vmatpush.msra.mxu0 0.0
    %937 = vmatpush.msra.mxu0 0.0
    %938 = vmatpush.msra.mxu0 0.0
    %939 = vmatpush.msra.mxu0 0.0
    %940 = vmatpush.msra.mxu0 0.0
    %941 = vmatpush.msra.mxu0 0.0
    %942 = vmatpush.msra.mxu0 %v868
    %943 = vmatpush.msra.mxu0 %v867
    %944 = vmatmul.f32.gmra.mxu0 %v926
    %v945 = vpop.f32.mrf.mxu0
    %v946 = vadd.f32 0.0, %v945
    %947 = vdwg.mxu0
    %v949 = vsel %vm352, %v757, 0
    %951 = vmatpush.msra.mxu0 0.0
    %952 = vmatpush.msra.mxu0 0.0
    %953 = vmatpush.msra.mxu0 0.0
    %954 = vmatpush.msra.mxu0 0.0
    %955 = vmatpush.msra.mxu0 0.0
    %956 = vmatpush.msra.mxu0 0.0
    %957 = vmatpush.msra.mxu0 0.0
    %958 = vmatpush.msra.mxu0 0.0
    %959 = vmatpush.msra.mxu0 0.0
    %960 = vmatpush.msra.mxu0 0.0
    %961 = vmatpush.msra.mxu0 0.0
    %962 = vmatpush.msra.mxu0 0.0
    %963 = vmatpush.msra.mxu0 0.0
    %964 = vmatpush.msra.mxu0 0.0
    %965 = vmatpush.msra.mxu0 %v870
    %966 = vmatpush.msra.mxu0 %v869
    %967 = vmatmul.f32.gmra.mxu0 %v949
    %v968 = vpop.f32.mrf.mxu0
    %v969 = vadd.f32 0.0, %v968
    %970 = vdwg.mxu0
    %v972 = vsel %vm352, %v783, 0
    %974 = vmatpush.msra.mxu0 0.0
    %975 = vmatpush.msra.mxu0 0.0
    %976 = vmatpush.msra.mxu0 0.0
    %977 = vmatpush.msra.mxu0 0.0
    %978 = vmatpush.msra.mxu0 0.0
    %979 = vmatpush.msra.mxu0 0.0
    %980 = vmatpush.msra.mxu0 0.0
    %981 = vmatpush.msra.mxu0 0.0
    %982 = vmatpush.msra.mxu0 0.0
    %983 = vmatpush.msra.mxu0 0.0
    %984 = vmatpush.msra.mxu0 0.0
    %985 = vmatpush.msra.mxu0 0.0
    %986 = vmatpush.msra.mxu0 0.0
    %987 = vmatpush.msra.mxu0 0.0
    %988 = vmatpush.msra.mxu0 %v872
    %989 = vmatpush.msra.mxu0 %v871
    %990 = vmatmul.f32.gmra.mxu0 %v972
    %v991 = vpop.f32.mrf.mxu0
    %v992 = vadd.f32 0.0, %v991
    %993 = vdwg.mxu0
    %v995 = vsel %vm352, %v809, 0
    %997 = vmatpush.msra.mxu0 0.0
    %998 = vmatpush.msra.mxu0 0.0
    %999 = vmatpush.msra.mxu0 0.0
    %1000 = vmatpush.msra.mxu0 0.0
    %1001 = vmatpush.msra.mxu0 0.0
    %1002 = vmatpush.msra.mxu0 0.0
    %1003 = vmatpush.msra.mxu0 0.0
    %1004 = vmatpush.msra.mxu0 0.0
    %1005 = vmatpush.msra.mxu0 0.0
    %1006 = vmatpush.msra.mxu0 0.0
    %1007 = vmatpush.msra.mxu0 0.0
    %1008 = vmatpush.msra.mxu0 0.0
    %1009 = vmatpush.msra.mxu0 0.0
    %1010 = vmatpush.msra.mxu0 0.0
    %1011 = vmatpush.msra.mxu0 %v874
    %1012 = vmatpush.msra.mxu0 %v873
    %1013 = vmatmul.f32.gmra.mxu0 %v995
    %v1014 = vpop.f32.mrf.mxu0
    %v1015 = vadd.f32 0.0, %v1014
    %1016 = vdwg.mxu0
    %v1018 = vsel %vm352, %v835, 0
    %1020 = vmatpush.msra.mxu0 0.0
    %1021 = vmatpush.msra.mxu0 0.0
    %1022 = vmatpush.msra.mxu0 0.0
    %1023 = vmatpush.msra.mxu0 0.0
    %1024 = vmatpush.msra.mxu0 0.0
    %1025 = vmatpush.msra.mxu0 0.0
    %1026 = vmatpush.msra.mxu0 0.0
    %1027 = vmatpush.msra.mxu0 0.0
    %1028 = vmatpush.msra.mxu0 0.0
    %1029 = vmatpush.msra.mxu0 0.0
    %1030 = vmatpush.msra.mxu0 0.0
    %1031 = vmatpush.msra.mxu0 0.0
    %1032 = vmatpush.msra.mxu0 0.0
    %1033 = vmatpush.msra.mxu0 0.0
    %1034 = vmatpush.msra.mxu0 %v876
    %1035 = vmatpush.msra.mxu0 %v875
    %1036 = vmatmul.f32.gmra.mxu0 %v1018
    %v1037 = vpop.f32.mrf.mxu0
    %v1038 = vadd.f32 0.0, %v1037
    %1039 = vdwg.mxu0
    %v1041 = vsel %vm352, %v861, 0
    %1043 = vmatpush.msra.mxu0 0.0
    %1044 = vmatpush.msra.mxu0 0.0
    %1045 = vmatpush.msra.mxu0 0.0
    %1046 = vmatpush.msra.mxu0 0.0
    %1047 = vmatpush.msra.mxu0 0.0
    %1048 = vmatpush.msra.mxu0 0.0
    %1049 = vmatpush.msra.mxu0 0.0
    %1050 = vmatpush.msra.mxu0 0.0
    %1051 = vmatpush.msra.mxu0 0.0
    %1052 = vmatpush.msra.mxu0 0.0
    %1053 = vmatpush.msra.mxu0 0.0
    %1054 = vmatpush.msra.mxu0 0.0
    %1055 = vmatpush.msra.mxu0 0.0
    %1056 = vmatpush.msra.mxu0 0.0
    %1057 = vmatpush.msra.mxu0 %v878
    %1058 = vmatpush.msra.mxu0 %v877
    %1059 = vmatmul.f32.gmra.mxu0 %v1041
    %v1060 = vpop.f32.mrf.mxu0
    %v1061 = vadd.f32 0.0, %v1060
    %1062 = vdwg.mxu0
    %v1063 = vsel %vm87, %v900, 0.0
    %v1064 = vsel %vm87, %v923, 0.0
    %v1065 = vadd.f32 %v1063, %v1064
    %v1066 = vsel %vm87, %v946, 0.0
    %v1067 = vadd.f32 %v1065, %v1066
    %v1068 = vsel %vm87, %v969, 0.0
    %v1069 = vadd.f32 %v1067, %v1068
    %v1070 = vsel %vm87, %v992, 0.0
    %v1071 = vsel %vm87, %v1015, 0.0
    %v1072 = vadd.f32 %v1070, %v1071
    %v1073 = vsel %vm87, %v1038, 0.0
    %v1074 = vadd.f32 %v1072, %v1073
    %v1075 = vsel %vm87, %v1061, 0.0
    %v1076 = vadd.f32 %v1074, %v1075
    %v1077 = vld [vmem:[%s5] sm:$0x1]
    %v1079 = vperm.slane %v1077, 0
    %v1081 = vadd.f32 %v1069, %v1079
    %v1082 = vadd.f32 %v1076, %v1079
    %1083 = vst.msk [vmem:[#allocation10] sm:$0xff] %vm87, %v1081
    %1084 = vst.msk [vmem:[#allocation10 + $0x8] sm:$0xff] %vm87, %v1082
    // Predicated region
    $region42: #{tpu_custom_call.1} parent=1 // pred_check
      _
    $region43: #{tpu_custom_call.1} parent=1 // pred_check_branch
      %1086 = sbr.rel (0) target = $region45
    $region44: #{tpu_custom_call.1} parent=1 // pred_region
      %1088 = vsyncadd [#allocation4], 0
      %s1089 = sshll.u32 [#allocation10], 4
      %s1090 = int_to_ptr.vmem [resolvable:$true] %s1089
      %s1091 = sshll.u32 %s6, 4
      %s1092 = int_to_ptr.hbm [resolvable:$true] %s1091
      %1097 = dma.vmem_to_hbm [thread:$0]  %s1090, 256, %s1092, [#allocation4], 128, 128, 8
    $region45: #{tpu_custom_call.1} parent=1 // pred_fallthru
      _
    // Predicated region
    $region46: #{tpu_custom_call.1} parent=1 // pred_check
      _
    $region47: #{tpu_custom_call.1} parent=1 // pred_check_branch
      %1099 = sbr.rel (0) target = $region49
    $region48: #{tpu_custom_call.1} parent=1 // pred_region
      %1101 = dma.done [#allocation4], 256
    $region49: #{tpu_custom_call.1} parent=1 // pred_fallthru
      _
    %1102 = vsyncpa [#allocation3], 1
    %1103 = vsyncpa [#allocation6], 1
    %1104 = vsyncpa [#allocation9], 1
    %1105 = vsyncpa [#allocation4], 1

</llo_original>
